<compile_context>
chip_gen: v6e
topology: v6e:2x2x1
jax: 0.10.0
libtpu: 0.0.40
codegen_flags: <defaults>
</compile_context>

<pallas_src>
import jax
import jax.numpy as jnp
from jax import lax
from jax.experimental import pallas as pl
from jax.experimental.pallas import tpu as pltpu

_LANES = 128
_GRAD_BLOCK_BYTES = 4 << 20        # ~4 MiB flow block (double-buffered -> 8 MiB)
_GRAD_PALLAS_MIN_BYTES = 256 * 1024  # below this, fused XLA beats a 2nd launch
_VMEM_LIMIT_BYTES = 48 << 20       # safe on v5e/v6e (128 MiB) and v7x (64 MiB)


def _l1_tile_rows_cap():
    """Per-generation cap on L1 block rows (rows of 128 f32 lanes)."""
    try:
        kind = jax.devices()[0].device_kind.lower()
    except Exception:  # pragma: no cover - defensive
        return 2048
    if ("v6" in kind) or ("v7" in kind) or ("7x" in kind):
        return 4096    # 2 MiB / input block
    return 2048        # v5e & older: 1 MiB / input block, fits 16 MiB default


# ----------------------------- Pallas kernels ------------------------------ #

def _make_l1_kernel(tile_r, chunk_r, rows_valid, blocks_per_core, need_mask):
    """sum|a1-b1| and sum|a2-b2| accumulated as per-core (8,128) partials."""
    n_chunks = tile_r // chunk_r

    def kernel(a1_ref, b1_ref, a2_ref, b2_ref, out_ref):
        i = pl.program_id(1)                       # sequential reduction axis

        @pl.when(i == 0)
        def _():
            out_ref[...] = jnp.zeros_like(out_ref)

        # Global row offset of this (possibly overshooting) block.
        block_row0 = (pl.program_id(0) * blocks_per_core + i) * tile_r
        if need_mask:
            row_ids = lax.broadcasted_iota(jnp.int32, (chunk_r, _LANES), 0)

        def chunk_body(c, accs):
            acc1, acc2 = accs
            r0 = pl.multiple_of(c * chunk_r, chunk_r)
            a1 = a1_ref[pl.ds(r0, chunk_r), :].astype(jnp.float32)
            b1 = b1_ref[pl.ds(r0, chunk_r), :].astype(jnp.float32)
            a2 = a2_ref[pl.ds(r0, chunk_r), :].astype(jnp.float32)
            b2 = b2_ref[pl.ds(r0, chunk_r), :].astype(jnp.float32)
            d1 = jnp.abs(a1 - b1)
            d2 = jnp.abs(a2 - b2)
            if need_mask:
                valid = (block_row0 + r0 + row_ids) < rows_valid
                d1 = jnp.where(valid, d1, 0.0)     # NaN-safe select of garbage
                d2 = jnp.where(valid, d2, 0.0)
            acc1 = acc1 + jnp.sum(d1.reshape(-1, 8, _LANES), axis=0)
            acc2 = acc2 + jnp.sum(d2.reshape(-1, 8, _LANES), axis=0)
            return acc1, acc2

        zero = jnp.zeros((8, _LANES), jnp.float32)
        acc1, acc2 = lax.fori_loop(0, n_chunks, chunk_body, (zero, zero))
        out_ref[0, 0] += acc1
        out_ref[0, 1] += acc2

    return kernel


def _make_grad_kernel(tile_b, H, W, nc, mask_slabs):
    """Accumulate per-pixel dx^2 / dy^2 into lane-aligned (H, W) maps."""

    def kernel(f_ref, ox_ref, oy_ref):
        @pl.when(pl.program_id(0) == 0)
        def _():
            ox_ref[...] = jnp.zeros_like(ox_ref)
            oy_ref[...] = jnp.zeros_like(oy_ref)

        col = lax.broadcasted_iota(jnp.int32, (H, W), 1)
        row = lax.broadcasted_iota(jnp.int32, (H, W), 0)
        # Roll the iota with the SAME roll as the data: the single wrap
        # column/row is excluded regardless of the rotation direction.
        mask_x = jnp.abs(pltpu.roll(col, W - 1, 1) - col) == 1
        mask_y = jnp.abs(pltpu.roll(row, H - 1, 0) - row) == 1
        base = pl.program_id(0) * tile_b

        @pl.loop(0, tile_b)
        def _(b):
            f = f_ref[b].astype(jnp.float32)           # (H, W), cast in VMEM
            dx = pltpu.roll(f, W - 1, 1) - f           # neighbour along W
            dy = pltpu.roll(f, H - 1, 0) - f           # neighbour along H
            mx, my = mask_x, mask_y
            if mask_slabs:
                valid = (base + b) < nc                # ragged batch tail
                mx = jnp.logical_and(mx, valid)
                my = jnp.logical_and(my, valid)
            ox_ref[...] += jnp.where(mx, dx * dx, 0.0)
            oy_ref[...] += jnp.where(my, dy * dy, 0.0)

    return kernel


# ------------------------------ JAX wrappers ------------------------------- #

def _fused_l1_sums(a1, b1, a2, b2):
    """Returns (sum|a1-b1|, sum|a2-b2|) in one fused, copy-free Pallas pass."""
    size = a1.size
    rows = size // _LANES                      # caller guarantees size % 128 == 0
    cap = _l1_tile_rows_cap()
    tile_r = min(cap, (rows // 8) * 8)         # multiple of 8, never > rows
    chunk_r = 64 if tile_r % 64 == 0 else 8
    nblocks = -(-rows // tile_r)
    blocks_per_core = -(-nblocks // 2)         # 2-way split for v7x's 2 TCs
    need_mask = (2 * blocks_per_core * tile_r) != rows

    def pack(x):
        return x.reshape(rows, _LANES)         # free reshape, native dtype

    in_spec = pl.BlockSpec(
        (tile_r, _LANES),
        # clamp so an overshooting core never indexes past the array; the
        # in-kernel row mask zeroes its (duplicated) contribution.
        lambda p, i: (jnp.minimum(p * blocks_per_core + i, nblocks - 1), 0))

    out = pl.pallas_call(
        _make_l1_kernel(tile_r, chunk_r, rows, blocks_per_core, need_mask),
        out_shape=jax.ShapeDtypeStruct((2, 2, 8, _LANES), jnp.float32),
        grid_spec=pltpu.PrefetchScalarGridSpec(
            num_scalar_prefetch=0,
            grid=(2, blocks_per_core),
            in_specs=[in_spec, in_spec, in_spec, in_spec],
            out_specs=pl.BlockSpec((1, 2, 8, _LANES),
                                   lambda p, i: (p, 0, 0, 0)),
        ),
        compiler_params=pltpu.CompilerParams(
            dimension_semantics=("parallel", "arbitrary"),
            vmem_limit_bytes=_VMEM_LIMIT_BYTES),
    )(pack(a1), pack(b1), pack(a2), pack(b2))

    sums = jnp.sum(out, axis=(0, 2, 3))        # O(1) final reduce in XLA
    return sums[0], sums[1]


def _grad_sq_sums_pallas(flow):
    """Returns (sum(dx^2), sum(dy^2)) over an NCHW flow tensor via Pallas."""
    N, C, H, W = flow.shape
    nc = N * C
    f = flow.reshape(nc, H, W)                 # free reshape, native dtype
    slab_bytes = H * W * flow.dtype.itemsize
    tile_b = max(1, min(nc, _GRAD_BLOCK_BYTES // max(1, slab_bytes)))
    grid_b = -(-nc // tile_b)
    mask_slabs = (grid_b * tile_b) != nc

    dx2_map, dy2_map = pl.pallas_call(
        _make_grad_kernel(tile_b, H, W, nc, mask_slabs),
        out_shape=(jax.ShapeDtypeStruct((H, W), jnp.float32),
                   jax.ShapeDtypeStruct((H, W), jnp.float32)),
        grid_spec=pltpu.PrefetchScalarGridSpec(
            num_scalar_prefetch=0,
            grid=(grid_b,),
            in_specs=[pl.BlockSpec((tile_b, H, W), lambda i: (i, 0, 0))],
            out_specs=[pl.BlockSpec((H, W), lambda i: (0, 0)),
                       pl.BlockSpec((H, W), lambda i: (0, 0))],
        ),
        compiler_params=pltpu.CompilerParams(
            dimension_semantics=("arbitrary",),
            vmem_limit_bytes=_VMEM_LIMIT_BYTES),
    )(f)
    return jnp.sum(dx2_map), jnp.sum(dy2_map)


def loss_function_dense(y, y_f, tgt, src, flow):
    """Pallas implementation of LossFunction_Dense.forward.

    Returns (ncc, grad) exactly as the PyTorch module:
      ncc  = mean|tgt - y| + 0.2 * mean|src - y_f|
      grad = ( mean((dW flow)^2) + mean((dH flow)^2) ) / 2
    """
    # ---- L1 terms (dominant pass) ----
    fuse_ok = (tgt.shape == y.shape and src.shape == y_f.shape
               and tgt.size == src.size
               and tgt.size % _LANES == 0 and tgt.size >= 8 * _LANES)
    if fuse_ok:
        s1, s2 = _fused_l1_sums(tgt, y, src, y_f)
        ncc = s1 / jnp.float32(tgt.size) + 0.2 * (s2 / jnp.float32(src.size))
    else:
        # tiny / lane-unaligned shapes: fused XLA reduction (same semantics)
        ncc = (jnp.mean(jnp.abs(tgt.astype(jnp.float32) - y.astype(jnp.float32)))
               + 0.2 * jnp.mean(jnp.abs(src.astype(jnp.float32)
                                        - y_f.astype(jnp.float32))))

    # ---- gradient (smoothness) term ----
    N, C, H, W = flow.shape
    flow_bytes = flow.size * flow.dtype.itemsize
    use_pallas_grad = (flow_bytes >= _GRAD_PALLAS_MIN_BYTES
                       and W % _LANES == 0 and H >= 3 and W >= 3)
    if use_pallas_grad:
        sdx, sdy = _grad_sq_sums_pallas(flow)
    else:
        # Small / lane-unaligned flow: a second kernel launch would dominate;
        # XLA fuses this elementwise reduction well.
        f32 = flow.astype(jnp.float32)
        dxx = f32[:, :, :, 1:] - f32[:, :, :, :-1]
        dyy = f32[:, :, 1:, :] - f32[:, :, :-1, :]
        sdx = jnp.sum(dxx * dxx)
        sdy = jnp.sum(dyy * dyy)

    mean_dx = sdx / jnp.float32(N * C * H * (W - 1))
    mean_dy = sdy / jnp.float32(N * C * (H - 1) * W)
    grad = (mean_dx + mean_dy) / 2.0
    return ncc, grad


# --------------------------------- driver ---------------------------------- #

if __name__ == "__main__":
    key = jax.random.PRNGKey(0)
    k1, k2, k3, k4, k5, k6 = jax.random.split(key, 6)

    N, C, H, W = 2, 4, 16, 16
    y    = jax.random.normal(k1, (N, C, H, W), dtype=jnp.float32)
    y_f  = jax.random.normal(k2, (N, C, H, W), dtype=jnp.float32)
    tgt  = jax.random.normal(k3, (N, C, H, W), dtype=jnp.float32)
    src  = jax.random.normal(k4, (N, C, H, W), dtype=jnp.float32)
    flow_small = jax.random.normal(k5, (N, 2, H, W), dtype=jnp.float32)
    # larger lane-dense flow exercises the Pallas gradient kernel
    flow_large = jax.random.normal(k6, (N, 2, 128, 128), dtype=jnp.float32)

    fn = jax.jit(loss_function_dense)

    def reference(y, y_f, tgt, src, flow):
        ncc = jnp.mean(jnp.abs(tgt - y)) + 0.2 * jnp.mean(jnp.abs(src - y_f))
        dyy = flow[:, :, 1:, :] - flow[:, :, :-1, :]
        dxx = flow[:, :, :, 1:] - flow[:, :, :, :-1]
        grad = (jnp.mean(dxx * dxx) + jnp.mean(dyy * dyy)) / 2.0
        return ncc, grad

    for flow in (flow_small, flow_large):
        ncc, grad = fn(y, y_f, tgt, src, flow)
        jax.block_until_ready((ncc, grad))
        ncc_ref, grad_ref = reference(y, y_f, tgt, src, flow)
        assert jnp.allclose(ncc, ncc_ref, rtol=1e-5, atol=1e-6), (ncc, ncc_ref)
        assert jnp.allclose(grad, grad_ref, rtol=1e-5, atol=1e-6), (grad, grad_ref)

    print("KERNEL_OK")
</pallas_src>

<mosaic_0001>
module attributes {stable_mosaic.version = 11 : i64} {
  func.func @kernel(%arg0: i32, %arg1: i32, %arg2: memref<16x128xf32, #tpu.memory_space<vmem>>, %arg3: memref<16x128xf32, #tpu.memory_space<vmem>>, %arg4: memref<16x128xf32, #tpu.memory_space<vmem>>, %arg5: memref<16x128xf32, #tpu.memory_space<vmem>>, %arg6: memref<1x2x8x128xf32, #tpu.memory_space<vmem>>) attributes {dimension_semantics = [#tpu.dimension_semantics<parallel>, #tpu.dimension_semantics<arbitrary>], iteration_bounds = array<i64: 2, 1>, scalar_prefetch = 0 : i64, scratch_operands = 0 : i64, tpu.core_type = #tpu.core_type<tc>, window_params = [{transform_indices = @transform_0, window_bounds = array<i64: 16, 128>}, {transform_indices = @transform_1, window_bounds = array<i64: 16, 128>}, {transform_indices = @transform_2, window_bounds = array<i64: 16, 128>}, {transform_indices = @transform_3, window_bounds = array<i64: 16, 128>}, {transform_indices = @transform_4, window_bounds = array<i64: 1, 2, 8, 128>}]} {
    %c0_i32 = arith.constant 0 : i32
    %0 = arith.cmpi eq, %arg1, %c0_i32 : i32
    %1 = arith.extui %0 : i1 to i32
    %c0_i32_0 = arith.constant 0 : i32
    %2 = arith.cmpi ne, %1, %c0_i32_0 : i32
    scf.if %2 {
      %cst_18 = arith.constant 0.000000e+00 : f32
      %22 = vector.broadcast %cst_18 : f32 to vector<1x2x8x128xf32>
      %c0_19 = arith.constant 0 : index
      %c0_20 = arith.constant 0 : index
      %c0_21 = arith.constant 0 : index
      %c0_22 = arith.constant 0 : index
      %23 = vector.load %arg6[%c0_19, %c0_20, %c0_21, %c0_22] : memref<1x2x8x128xf32, #tpu.memory_space<vmem>>, vector<1x2x8x128xf32>
      tpu.vector_store %arg6[%c0_19, %c0_20, %c0_21, %c0_22], %22 {strides = array<i32>} : memref<1x2x8x128xf32, #tpu.memory_space<vmem>>, vector<1x2x8x128xf32>,
    } else {
    }
    %c1_i32 = arith.constant 1 : i32
    %3 = arith.muli %arg0, %c1_i32 : i32
    %4 = arith.addi %3, %arg1 : i32
    %c16_i32 = arith.constant 16 : i32
    %5 = arith.muli %4, %c16_i32 : i32
    %6 = tpu.iota {dimensions = array<i32: 0>} : vector<8x128xi32>
    %cst = arith.constant 0.000000e+00 : f32
    %7 = vector.broadcast %cst : f32 to vector<8x128xf32>
    %c0_i32_1 = arith.constant 0 : i32
    %c2_i32 = arith.constant 2 : i32
    %8 = arith.addi %c0_i32_1, %c2_i32 : i32
    %c1_i32_2 = arith.constant 1 : i32
    %9:2 = scf.for %arg7 = %c0_i32_1 to %8 step %c1_i32_2 iter_args(%arg8 = %7, %arg9 = %7) -> (vector<8x128xf32>, vector<8x128xf32>)  : i32 {
      %c8_i32 = arith.constant 8 : i32
      %22 = arith.muli %arg7, %c8_i32 : i32
      %23 = tpu.assume_multiple %22, 8 : i32
      %24 = arith.index_cast %23 : i32 to index
      %c0_18 = arith.constant 0 : index
      %25 = vector.load %arg2[%24, %c0_18] : memref<16x128xf32, #tpu.memory_space<vmem>>, vector<8x128xf32>
      %26 = arith.index_cast %23 : i32 to index
      %c0_19 = arith.constant 0 : index
      %27 = vector.load %arg3[%26, %c0_19] : memref<16x128xf32, #tpu.memory_space<vmem>>, vector<8x128xf32>
      %28 = arith.index_cast %23 : i32 to index
      %c0_20 = arith.constant 0 : index
      %29 = vector.load %arg4[%28, %c0_20] : memref<16x128xf32, #tpu.memory_space<vmem>>, vector<8x128xf32>
      %30 = arith.index_cast %23 : i32 to index
      %c0_21 = arith.constant 0 : index
      %31 = vector.load %arg5[%30, %c0_21] : memref<16x128xf32, #tpu.memory_space<vmem>>, vector<8x128xf32>
      %32 = arith.subf %25, %27 : vector<8x128xf32>
      %33 = math.absf %32 : vector<8x128xf32>
      %34 = arith.subf %29, %31 : vector<8x128xf32>
      %35 = math.absf %34 : vector<8x128xf32>
      %36 = arith.addi %5, %23 : i32
      %37 = vector.broadcast %36 : i32 to vector<8x128xi32>
      %38 = arith.addi %37, %6 : vector<8x128xi32>
      %c16_i32_22 = arith.constant 16 : i32
      %39 = vector.broadcast %c16_i32_22 : i32 to vector<8x128xi32>
      %40 = arith.cmpi slt, %38, %39 : vector<8x128xi32>
      %cst_23 = arith.constant 0.000000e+00 : f32
      %41 = vector.broadcast %cst_23 : f32 to vector<8x128xf32>
      %42 = arith.select %40, %33, %41 : vector<8x128xi1>, vector<8x128xf32>
      %cst_24 = arith.constant 0.000000e+00 : f32
      %43 = vector.broadcast %cst_24 : f32 to vector<8x128xf32>
      %44 = arith.select %40, %35, %43 : vector<8x128xi1>, vector<8x128xf32>
      %45 = vector.shape_cast %42 : vector<8x128xf32> to vector<1x8x128xf32>
      %cst_25 = arith.constant dense<0.000000e+00> : vector<8x128xf32>
      %46 = vector.multi_reduction <add>, %45, %cst_25 [0] : vector<1x8x128xf32> to vector<8x128xf32>
      %47 = arith.addf %arg8, %46 : vector<8x128xf32>
      %48 = vector.shape_cast %44 : vector<8x128xf32> to vector<1x8x128xf32>
      %cst_26 = arith.constant dense<0.000000e+00> : vector<8x128xf32>
      %49 = vector.multi_reduction <add>, %48, %cst_26 [0] : vector<1x8x128xf32> to vector<8x128xf32>
      %50 = arith.addf %arg9, %49 : vector<8x128xf32>
      scf.yield %47, %50 : vector<8x128xf32>, vector<8x128xf32>
    }
    %c2_i32_3 = arith.constant 2 : i32
    %c0 = arith.constant 0 : index
    %c0_4 = arith.constant 0 : index
    %c0_5 = arith.constant 0 : index
    %c0_6 = arith.constant 0 : index
    %10 = vector.load %arg6[%c0, %c0_4, %c0_5, %c0_6] : memref<1x2x8x128xf32, #tpu.memory_space<vmem>>, vector<1x1x8x128xf32>
    %11 = vector.shape_cast %10 : vector<1x1x8x128xf32> to vector<8x128xf32>
    %12 = arith.addf %11, %9#0 : vector<8x128xf32>
    %c0_7 = arith.constant 0 : index
    %c0_8 = arith.constant 0 : index
    %c0_9 = arith.constant 0 : index
    %c0_10 = arith.constant 0 : index
    %13 = vector.load %arg6[%c0_7, %c0_8, %c0_9, %c0_10] : memref<1x2x8x128xf32, #tpu.memory_space<vmem>>, vector<1x1x8x128xf32>
    %14 = vector.shape_cast %13 : vector<1x1x8x128xf32> to vector<8x128xf32>
    %15 = vector.shape_cast %12 : vector<8x128xf32> to vector<1x1x8x128xf32>
    tpu.vector_store %arg6[%c0_7, %c0_8, %c0_9, %c0_10], %15 {strides = array<i32>} : memref<1x2x8x128xf32, #tpu.memory_space<vmem>>, vector<1x1x8x128xf32>,
    %c0_11 = arith.constant 0 : index
    %c1 = arith.constant 1 : index
    %c0_12 = arith.constant 0 : index
    %c0_13 = arith.constant 0 : index
    %16 = vector.load %arg6[%c0_11, %c1, %c0_12, %c0_13] : memref<1x2x8x128xf32, #tpu.memory_space<vmem>>, vector<1x1x8x128xf32>
    %17 = vector.shape_cast %16 : vector<1x1x8x128xf32> to vector<8x128xf32>
    %18 = arith.addf %17, %9#1 : vector<8x128xf32>
    %c0_14 = arith.constant 0 : index
    %c1_15 = arith.constant 1 : index
    %c0_16 = arith.constant 0 : index
    %c0_17 = arith.constant 0 : index
    %19 = vector.load %arg6[%c0_14, %c1_15, %c0_16, %c0_17] : memref<1x2x8x128xf32, #tpu.memory_space<vmem>>, vector<1x1x8x128xf32>
    %20 = vector.shape_cast %19 : vector<1x1x8x128xf32> to vector<8x128xf32>
    %21 = vector.shape_cast %18 : vector<8x128xf32> to vector<1x1x8x128xf32>
    tpu.vector_store %arg6[%c0_14, %c1_15, %c0_16, %c0_17], %21 {strides = array<i32>} : memref<1x2x8x128xf32, #tpu.memory_space<vmem>>, vector<1x1x8x128xf32>,
    return
  }
  func.func @transform_0(%arg0: i32, %arg1: i32) -> (i32, i32) {
    %c1_i32 = arith.constant 1 : i32
    %0 = arith.muli %arg0, %c1_i32 : i32
    %1 = arith.addi %0, %arg1 : i32
    %c0_i32 = arith.constant 0 : i32
    %2 = arith.minsi %1, %c0_i32 : i32
    %c0_i32_0 = arith.constant 0 : i32
    %c0_i32_1 = arith.constant 0 : i32
    return %2, %c0_i32_0 : i32, i32
  }
  func.func @transform_1(%arg0: i32, %arg1: i32) -> (i32, i32) {
    %c1_i32 = arith.constant 1 : i32
    %0 = arith.muli %arg0, %c1_i32 : i32
    %1 = arith.addi %0, %arg1 : i32
    %c0_i32 = arith.constant 0 : i32
    %2 = arith.minsi %1, %c0_i32 : i32
    %c0_i32_0 = arith.constant 0 : i32
    %c0_i32_1 = arith.constant 0 : i32
    return %2, %c0_i32_0 : i32, i32
  }
  func.func @transform_2(%arg0: i32, %arg1: i32) -> (i32, i32) {
    %c1_i32 = arith.constant 1 : i32
    %0 = arith.muli %arg0, %c1_i32 : i32
    %1 = arith.addi %0, %arg1 : i32
    %c0_i32 = arith.constant 0 : i32
    %2 = arith.minsi %1, %c0_i32 : i32
    %c0_i32_0 = arith.constant 0 : i32
    %c0_i32_1 = arith.constant 0 : i32
    return %2, %c0_i32_0 : i32, i32
  }
  func.func @transform_3(%arg0: i32, %arg1: i32) -> (i32, i32) {
    %c1_i32 = arith.constant 1 : i32
    %0 = arith.muli %arg0, %c1_i32 : i32
    %1 = arith.addi %0, %arg1 : i32
    %c0_i32 = arith.constant 0 : i32
    %2 = arith.minsi %1, %c0_i32 : i32
    %c0_i32_0 = arith.constant 0 : i32
    %c0_i32_1 = arith.constant 0 : i32
    return %2, %c0_i32_0 : i32, i32
  }
  func.func @transform_4(%arg0: i32, %arg1: i32) -> (i32, i32, i32, i32) {
    %c0_i32 = arith.constant 0 : i32
    %c0_i32_0 = arith.constant 0 : i32
    %c0_i32_1 = arith.constant 0 : i32
    %c0_i32_2 = arith.constant 0 : i32
    return %arg0, %c0_i32, %c0_i32_0, %c0_i32_1 : i32, i32, i32, i32
  }
}

</mosaic_0001>

<llo_original>
// kernel: loss_function_dense.1
$region0: #{loss_function_dense.1}
  #allocation0 [shape = 'u32[]', space=smem, size = 0x4, offset = 0x4, fixed_abs, tag = 'smem constant byte address 0x4 - core index']
  #allocation1 [shape = 'u32[144,128]{1,0:T(1,128)}', space=vmem, size = 0x12000, scoped, tag = 'internal scratch']
  %s0 = inlined_call_operand.vmem [shape: f32[16,128], index: 0, kind: input, shape index: {}]
  %s1 = inlined_call_operand.vmem [shape: f32[16,128], index: 1, kind: input, shape index: {}]
  %s2 = inlined_call_operand.vmem [shape: f32[16,128], index: 2, kind: input, shape index: {}]
  %s3 = inlined_call_operand.vmem [shape: f32[16,128], index: 3, kind: input, shape index: {}]
  %s4 = inlined_call_operand.vmem [shape: f32[2,2,8,128], index: 4, kind: output, shape index: {}]
  %s5 = sld [smem:[#allocation0]]
  $region60: #{loss_function_dense.1} parent=0
    _
  %s7 = ssub.s32 1, %s5
  %s8 = scalar_select 0, %s7, %s5
  loop: start=0, step=1, limit=4
  $region2: #{loss_function_dense.1} parent=0 // loop_pre_header
    _
  $region3: #{loss_function_dense.1} parent=0 // loop_header
    %s10 = sphi 0, %s14
    %p11 = scmp.ge.s32.totalorder %s10, 4
    %s17 = sphi 0, %s29
    %s18 = sphi 0, %s25
    %s19 = sphi 0, %s17
    %s20 = sphi 0, %s18
    %s21 = sphi 0, %s19
    %s22 = sphi 0, %s20
    %s38 = sphi 0, %s40
    %s41 = sphi 0, %s38
    %s42 = sphi 0, %s41
    %s58 = sphi 0, %s42
    %s70 = sphi 0, %s72
    %s73 = sphi 0, %s70
    %s74 = sphi 0, %s73
    %s90 = sphi 0, %s74
    %s102 = sphi 0, %s104
    %s105 = sphi 0, %s102
    %s106 = sphi 0, %s105
    %s122 = sphi 0, %s106
    %s134 = sphi 0, %s136
    %s137 = sphi 0, %s134
    %s138 = sphi 0, %s137
    %s154 = sphi 0, %s138
    %s160 = sphi 0, %s162
    %s163 = sphi 0, %s160
    %s164 = sphi 0, %s163
    %s180 = sphi 0, %s164
  $region4: #{loss_function_dense.1} parent=0 // loop_header_branch
    %13 = sbr.rel (%p11) target = $region8
  $region5: #{loss_function_dense.1} parent=0 // loop_body
    %s15 = ssub.s32 %s10, 1
    %s16 = ssub.s32 %s10, 2
    %s23 = sadd.s32 1, %s18
    %p24 = scmp.ge.s32.totalorder %s23, 1
    %s25 = scalar_select %p24, 0, %s23
    %s26 = sadd.s32 1, %s17
    %s27 = scalar_select %p24, %s26, %s17
    %p28 = scmp.ge.s32.totalorder %s27, 2
    %s29 = scalar_select %p28, 0, %s27
    %s30 = sadd.s32 %s17, %s18
    %p31 = scmp.lt.s32.totalorder %s30, 0
    %s32 = scalar_select %p31, %s30, 0
    %s33 = sadd.s32 %s29, %s25
    %p34 = scmp.lt.s32.totalorder %s33, 0
    %s35 = scalar_select %p34, %s33, 0
    %s36 = ssub.s32 %s32, %s35
    %p37 = scmp.eq.s32.totalorder %s36, 0
    %s39 = sadd.s32 %s38, 1
    %s40 = scalar_select %p37, %s38, %s39
    %p43 = pneg %p37
    %p44 = scmp.eq.s32.totalorder %s10, 1
    %p45 = por %p43, %p44
    %p46 = scmp.ne.s32.totalorder %s38, %s41
    %p47 = scmp.eq.s32.totalorder %s10, 0
    %p48 = por %p46, %p47
    %p49 = scmp.ne.s32.totalorder %s38, %s41
    %p50 = scmp.eq.s32.totalorder %s15, 1
    %p51 = por %p49, %p50
    %p52 = scmp.ne.s32.totalorder %s41, %s42
    %p53 = scmp.eq.s32.totalorder %s15, 0
    %p54 = por %p52, %p53
    %p55 = scmp.ne.s32.totalorder %s41, %s42
    %p56 = scmp.eq.s32.totalorder %s16, 1
    %p57 = por %p55, %p56
    %p59 = scmp.ne.s32.totalorder %s42, %s58
    %p60 = scmp.eq.s32.totalorder %s16, 0
    %p61 = por %p59, %p60
    %s62 = sadd.s32 %s17, %s18
    %p63 = scmp.lt.s32.totalorder %s62, 0
    %s64 = scalar_select %p63, %s62, 0
    %s65 = sadd.s32 %s29, %s25
    %p66 = scmp.lt.s32.totalorder %s65, 0
    %s67 = scalar_select %p66, %s65, 0
    %s68 = ssub.s32 %s64, %s67
    %p69 = scmp.eq.s32.totalorder %s68, 0
    %s71 = sadd.s32 %s70, 1
    %s72 = scalar_select %p69, %s70, %s71
    %p75 = pneg %p69
    %p76 = scmp.eq.s32.totalorder %s10, 1
    %p77 = por %p75, %p76
    %p78 = scmp.ne.s32.totalorder %s70, %s73
    %p79 = scmp.eq.s32.totalorder %s10, 0
    %p80 = por %p78, %p79
    %p81 = scmp.ne.s32.totalorder %s70, %s73
    %p82 = scmp.eq.s32.totalorder %s15, 1
    %p83 = por %p81, %p82
    %p84 = scmp.ne.s32.totalorder %s73, %s74
    %p85 = scmp.eq.s32.totalorder %s15, 0
    %p86 = por %p84, %p85
    %p87 = scmp.ne.s32.totalorder %s73, %s74
    %p88 = scmp.eq.s32.totalorder %s16, 1
    %p89 = por %p87, %p88
    %p91 = scmp.ne.s32.totalorder %s74, %s90
    %p92 = scmp.eq.s32.totalorder %s16, 0
    %p93 = por %p91, %p92
    %s94 = sadd.s32 %s17, %s18
    %p95 = scmp.lt.s32.totalorder %s94, 0
    %s96 = scalar_select %p95, %s94, 0
    %s97 = sadd.s32 %s29, %s25
    %p98 = scmp.lt.s32.totalorder %s97, 0
    %s99 = scalar_select %p98, %s97, 0
    %s100 = ssub.s32 %s96, %s99
    %p101 = scmp.eq.s32.totalorder %s100, 0
    %s103 = sadd.s32 %s102, 1
    %s104 = scalar_select %p101, %s102, %s103
    %p107 = pneg %p101
    %p108 = scmp.eq.s32.totalorder %s10, 1
    %p109 = por %p107, %p108
    %p110 = scmp.ne.s32.totalorder %s102, %s105
    %p111 = scmp.eq.s32.totalorder %s10, 0
    %p112 = por %p110, %p111
    %p113 = scmp.ne.s32.totalorder %s102, %s105
    %p114 = scmp.eq.s32.totalorder %s15, 1
    %p115 = por %p113, %p114
    %p116 = scmp.ne.s32.totalorder %s105, %s106
    %p117 = scmp.eq.s32.totalorder %s15, 0
    %p118 = por %p116, %p117
    %p119 = scmp.ne.s32.totalorder %s105, %s106
    %p120 = scmp.eq.s32.totalorder %s16, 1
    %p121 = por %p119, %p120
    %p123 = scmp.ne.s32.totalorder %s106, %s122
    %p124 = scmp.eq.s32.totalorder %s16, 0
    %p125 = por %p123, %p124
    %s126 = sadd.s32 %s17, %s18
    %p127 = scmp.lt.s32.totalorder %s126, 0
    %s128 = scalar_select %p127, %s126, 0
    %s129 = sadd.s32 %s29, %s25
    %p130 = scmp.lt.s32.totalorder %s129, 0
    %s131 = scalar_select %p130, %s129, 0
    %s132 = ssub.s32 %s128, %s131
    %p133 = scmp.eq.s32.totalorder %s132, 0
    %s135 = sadd.s32 %s134, 1
    %s136 = scalar_select %p133, %s134, %s135
    %p139 = pneg %p133
    %p140 = scmp.eq.s32.totalorder %s10, 1
    %p141 = por %p139, %p140
    %p142 = scmp.ne.s32.totalorder %s134, %s137
    %p143 = scmp.eq.s32.totalorder %s10, 0
    %p144 = por %p142, %p143
    %p145 = scmp.ne.s32.totalorder %s134, %s137
    %p146 = scmp.eq.s32.totalorder %s15, 1
    %p147 = por %p145, %p146
    %p148 = scmp.ne.s32.totalorder %s137, %s138
    %p149 = scmp.eq.s32.totalorder %s15, 0
    %p150 = por %p148, %p149
    %p151 = scmp.ne.s32.totalorder %s137, %s138
    %p152 = scmp.eq.s32.totalorder %s16, 1
    %p153 = por %p151, %p152
    %p155 = scmp.ne.s32.totalorder %s138, %s154
    %p156 = scmp.eq.s32.totalorder %s16, 0
    %p157 = por %p155, %p156
    %s158 = ssub.s32 %s17, %s29
    %p159 = scmp.eq.s32.totalorder %s158, 0
    %s161 = sadd.s32 %s160, 1
    %s162 = scalar_select %p159, %s160, %s161
    %p165 = pneg %p159
    %p166 = scmp.eq.s32.totalorder %s10, 1
    %p167 = por %p165, %p166
    %p168 = scmp.ne.s32.totalorder %s160, %s163
    %p169 = scmp.eq.s32.totalorder %s10, 0
    %p170 = por %p168, %p169
    %p171 = scmp.ne.s32.totalorder %s160, %s163
    %p172 = scmp.eq.s32.totalorder %s15, 1
    %p173 = por %p171, %p172
    %p174 = scmp.ne.s32.totalorder %s163, %s164
    %p175 = scmp.eq.s32.totalorder %s15, 0
    %p176 = por %p174, %p175
    %p177 = scmp.ne.s32.totalorder %s163, %s164
    %p178 = scmp.eq.s32.totalorder %s16, 1
    %p179 = por %p177, %p178
    %p181 = scmp.ne.s32.totalorder %s164, %s180
    %p182 = scmp.eq.s32.totalorder %s16, 0
    %p183 = por %p181, %p182
    %p184 = scmp.le.s32.totalorder 1, %s10
    %p185 = scmp.lt.s32.totalorder %s10, 3
    %p186 = pnand %p184, %p185
    %p187 = pneg %p186
    // Predicated region
    $region9: #{loss_function_dense.1} parent=5 // pred_check
      _
    $region10: #{loss_function_dense.1} parent=5 // pred_check_branch
      %189 = sbr.rel (%p186) target = $region12
    $region11: #{loss_function_dense.1} parent=5 // pred_region
      %s190 = ssub.s32 %s10, 1
    $region12: #{loss_function_dense.1} parent=5 // pred_fallthru
      _
    %p191 = scmp.lt.s32.totalorder %s10, 2
    // Predicated region
    $region13: #{loss_function_dense.1} parent=5 // pred_check
      %p192 = pneg %p191
    $region14: #{loss_function_dense.1} parent=5 // pred_check_branch
      %194 = sbr.rel (%p192) target = $region16
    $region15: #{loss_function_dense.1} parent=5 // pred_region
      // Predicated region
      $region17: #{loss_function_dense.1} parent=15 // pred_check
        %p195 = pneg %p48
      $region18: #{loss_function_dense.1} parent=15 // pred_check_branch
        %197 = sbr.rel (%p195) target = $region20
      $region19: #{loss_function_dense.1} parent=15 // pred_region
        %s198 = sadd.s32 %s17, %s18
        %p199 = scmp.lt.s32.totalorder %s198, 0
        %s200 = scalar_select %p199, %s198, 0
        %s201 = smul.u32 2, %s200
        %p202 = scmp.lt.s32.totalorder %s201, 1
        %s203 = scalar_select %p202, %s201, 1
        %s204 = smul.addr %s203, 8
        %s205 = scalar_lea.vmem %s0, %s204
        %s206 = sadd.s32 %s17, %s18
        %p207 = scmp.lt.s32.totalorder %s206, 0
        %s208 = scalar_select %p207, %s206, 0
        %s209 = smul.u32 2, %s208
      $region20: #{loss_function_dense.1} parent=15 // pred_fallthru
        _
      // Predicated region
      $region21: #{loss_function_dense.1} parent=15 // pred_check
        %p210 = pneg %p80
      $region22: #{loss_function_dense.1} parent=15 // pred_check_branch
        %212 = sbr.rel (%p210) target = $region24
      $region23: #{loss_function_dense.1} parent=15 // pred_region
        %s213 = sadd.s32 %s17, %s18
        %p214 = scmp.lt.s32.totalorder %s213, 0
        %s215 = scalar_select %p214, %s213, 0
        %s216 = smul.u32 2, %s215
        %p217 = scmp.lt.s32.totalorder %s216, 1
        %s218 = scalar_select %p217, %s216, 1
        %s219 = smul.addr %s218, 8
        %s220 = scalar_lea.vmem %s1, %s219
        %s221 = sadd.s32 %s17, %s18
        %p222 = scmp.lt.s32.totalorder %s221, 0
        %s223 = scalar_select %p222, %s221, 0
        %s224 = smul.u32 2, %s223
      $region24: #{loss_function_dense.1} parent=15 // pred_fallthru
        _
      // Predicated region
      $region25: #{loss_function_dense.1} parent=15 // pred_check
        %p225 = pneg %p112
      $region26: #{loss_function_dense.1} parent=15 // pred_check_branch
        %227 = sbr.rel (%p225) target = $region28
      $region27: #{loss_function_dense.1} parent=15 // pred_region
        %s228 = sadd.s32 %s17, %s18
        %p229 = scmp.lt.s32.totalorder %s228, 0
        %s230 = scalar_select %p229, %s228, 0
        %s231 = smul.u32 2, %s230
        %p232 = scmp.lt.s32.totalorder %s231, 1
        %s233 = scalar_select %p232, %s231, 1
        %s234 = smul.addr %s233, 8
        %s235 = scalar_lea.vmem %s2, %s234
        %s236 = sadd.s32 %s17, %s18
        %p237 = scmp.lt.s32.totalorder %s236, 0
        %s238 = scalar_select %p237, %s236, 0
        %s239 = smul.u32 2, %s238
      $region28: #{loss_function_dense.1} parent=15 // pred_fallthru
        _
      // Predicated region
      $region29: #{loss_function_dense.1} parent=15 // pred_check
        %p240 = pneg %p144
      $region30: #{loss_function_dense.1} parent=15 // pred_check_branch
        %242 = sbr.rel (%p240) target = $region32
      $region31: #{loss_function_dense.1} parent=15 // pred_region
        %s243 = sadd.s32 %s17, %s18
        %p244 = scmp.lt.s32.totalorder %s243, 0
        %s245 = scalar_select %p244, %s243, 0
        %s246 = smul.u32 2, %s245
        %p247 = scmp.lt.s32.totalorder %s246, 1
        %s248 = scalar_select %p247, %s246, 1
        %s249 = smul.addr %s248, 8
        %s250 = scalar_lea.vmem %s3, %s249
        %s251 = sadd.s32 %s17, %s18
        %p252 = scmp.lt.s32.totalorder %s251, 0
        %s253 = scalar_select %p252, %s251, 0
        %s254 = smul.u32 2, %s253
      $region32: #{loss_function_dense.1} parent=15 // pred_fallthru
        _
    $region16: #{loss_function_dense.1} parent=5 // pred_fallthru
      _
    %p255 = scmp.le.s32.totalorder 1, %s10
    %p256 = scmp.lt.s32.totalorder %s10, 3
    %p257 = pnand %p255, %p256
    %p258 = pneg %p257
    // Predicated region
    $region33: #{loss_function_dense.1} parent=5 // pred_check
      _
    $region34: #{loss_function_dense.1} parent=5 // pred_check_branch
      %260 = sbr.rel (%p257) target = $region36
    $region35: #{loss_function_dense.1} parent=5 // pred_region
      %s261 = ssub.s32 %s10, 1
      %s262 = sadd.s32 %s19, %s20
      %p263 = scmp.lt.s32.totalorder %s262, 0
      %s264 = scalar_select %p263, %s262, 0
      %s265 = smul.u32 2, %s264
      %p266 = scmp.lt.s32.totalorder %s265, 1
      %s267 = scalar_select %p266, %s265, 1
      %s268 = smul.addr %s267, 8
      %s269 = scalar_lea.vmem %s0, %s268
      %p270 = pneg %p54
      %p271 = pneg %p51
      %s272 = sadd.s32 %s19, %s20
      %p273 = scmp.lt.s32.totalorder %s272, 0
      %s274 = scalar_select %p273, %s272, 0
      %s275 = smul.u32 2, %s274
      %p276 = scmp.lt.s32.totalorder %s275, 1
      %s277 = scalar_select %p276, %s275, 1
      %s278 = smul.addr %s277, 8
      %s279 = scalar_lea.vmem %s1, %s278
      %p280 = pneg %p86
      %p281 = pneg %p83
      %s282 = sadd.s32 %s19, %s20
      %p283 = scmp.lt.s32.totalorder %s282, 0
      %s284 = scalar_select %p283, %s282, 0
      %s285 = smul.u32 2, %s284
      %p286 = scmp.lt.s32.totalorder %s285, 1
      %s287 = scalar_select %p286, %s285, 1
      %s288 = smul.addr %s287, 8
      %s289 = scalar_lea.vmem %s2, %s288
      %p290 = pneg %p118
      %p291 = pneg %p115
      %s292 = sadd.s32 %s19, %s20
      %p293 = scmp.lt.s32.totalorder %s292, 0
      %s294 = scalar_select %p293, %s292, 0
      %s295 = smul.u32 2, %s294
      %p296 = scmp.lt.s32.totalorder %s295, 1
      %s297 = scalar_select %p296, %s295, 1
      %s298 = smul.addr %s297, 8
      %s299 = scalar_lea.vmem %s3, %s298
      %p300 = pneg %p150
      %p301 = pneg %p147
      %p302 = pneg %p176
      %p303 = pneg %p173
      %p304 = scmp.lt.s32.totalorder %s19, 1
      %s305 = scalar_select %p304, %s19, 1
      %s306 = smul.addr %s305, 2
      %s307 = smul.addr %s306, 8
      %s308 = scalar_lea.vmem %s4, %s307
      %s309 = sadd.s32 %s19, %s20
      %p310 = scmp.lt.s32.totalorder %s309, 0
      %s311 = scalar_select %p310, %s309, 0
      %s312 = smul.u32 2, %s311
      %p313 = scmp.lt.s32.totalorder %s312, 1
      %s314 = scalar_select %p313, %s312, 1
      %s315 = smul.addr %s314, 8
      %s316 = scalar_lea.vmem %s0, %s315
      %s317 = sadd.s32 %s19, %s20
      %p318 = scmp.lt.s32.totalorder %s317, 0
      %s319 = scalar_select %p318, %s317, 0
      %s320 = smul.u32 2, %s319
      %s321 = sadd.s32 %s19, %s20
      %p322 = scmp.lt.s32.totalorder %s321, 0
      %s323 = scalar_select %p322, %s321, 0
      %s324 = smul.u32 2, %s323
      %p325 = scmp.lt.s32.totalorder %s324, 1
      %s326 = scalar_select %p325, %s324, 1
      %s327 = smul.addr %s326, 8
      %s328 = scalar_lea.vmem %s1, %s327
      %s329 = sadd.s32 %s19, %s20
      %p330 = scmp.lt.s32.totalorder %s329, 0
      %s331 = scalar_select %p330, %s329, 0
      %s332 = smul.u32 2, %s331
      %s333 = sadd.s32 %s19, %s20
      %p334 = scmp.lt.s32.totalorder %s333, 0
      %s335 = scalar_select %p334, %s333, 0
      %s336 = smul.u32 2, %s335
      %p337 = scmp.lt.s32.totalorder %s336, 1
      %s338 = scalar_select %p337, %s336, 1
      %s339 = smul.addr %s338, 8
      %s340 = scalar_lea.vmem %s2, %s339
      %s341 = sadd.s32 %s19, %s20
      %p342 = scmp.lt.s32.totalorder %s341, 0
      %s343 = scalar_select %p342, %s341, 0
      %s344 = smul.u32 2, %s343
      %s345 = sadd.s32 %s19, %s20
      %p346 = scmp.lt.s32.totalorder %s345, 0
      %s347 = scalar_select %p346, %s345, 0
      %s348 = smul.u32 2, %s347
      %p349 = scmp.lt.s32.totalorder %s348, 1
      %s350 = scalar_select %p349, %s348, 1
      %s351 = smul.addr %s350, 8
      %s352 = scalar_lea.vmem %s3, %s351
      %s353 = sadd.s32 %s19, %s20
      %p354 = scmp.lt.s32.totalorder %s353, 0
      %s355 = scalar_select %p354, %s353, 0
      %s356 = smul.u32 2, %s355
      %p357 = scmp.lt.s32.totalorder %s19, 1
      %s358 = scalar_select %p357, %s19, 1
      %s359 = smul.addr %s358, 2
      %s360 = smul.addr %s359, 8
      %s361 = scalar_lea.vmem %s4, %s360
      %p362 = scmp.eq.s32.totalorder %s20, 0
      // Predicated region
      $region37: #{loss_function_dense.1} parent=35 // pred_check
        %p363 = pneg %p362
      $region38: #{loss_function_dense.1} parent=35 // pred_check_branch
        %365 = sbr.rel (%p363) target = $region40
      $region39: #{loss_function_dense.1} parent=35 // pred_region
        %366 = vst [vmem:[%s361] sm:$0xff] 0.0
        %367 = vst [vmem:[%s361 + $0x8] sm:$0xff] 0.0
      $region40: #{loss_function_dense.1} parent=35 // pred_fallthru
        _
      %s368 = sadd.s32 %s19, %s20
      %s369 = smul.u32 %s368, 16
      %v370 = vlaneseq
      %v371 = vshrl.u32 %v370, 7
      loop: start=0, step=1, limit=2
      $region41: #{loss_function_dense.1} parent=35 // loop_pre_header
        _
      $region42: #{loss_function_dense.1} parent=35 // loop_header
        %s373 = sphi 0, %s377
        %p374 = scmp.ge.s32.totalorder %s373, 2
        %v378 = vphi 0.0, %v400
        %v379 = vphi 0.0, %v402
      $region43: #{loss_function_dense.1} parent=35 // loop_header_branch
        %376 = sbr.rel (%p374) target = $region47
      $region44: #{loss_function_dense.1} parent=35 // loop_body
        %s380 = smul.u32 %s373, 8
        %s381 = scalar_lea.vmem %s316, %s380
        %v382 = vld [vmem:[%s381] sm:$0xff]
        %s383 = scalar_lea.vmem %s328, %s380
        %v384 = vld [vmem:[%s383] sm:$0xff]
        %s385 = scalar_lea.vmem %s340, %s380
        %v386 = vld [vmem:[%s385] sm:$0xff]
        %s387 = scalar_lea.vmem %s352, %s380
        %v388 = vld [vmem:[%s387] sm:$0xff]
        %v389 = vsub.f32 %v382, %v384
        %v390 = vand.u32 2147483647, %v389
        %v391 = vsub.f32 %v386, %v388
        %v392 = vand.u32 2147483647, %v391
        %s393 = sadd.s32 %s369, %s380
        %v394 = vstv %s393
        %v395 = vadd.s32 %v394, %v371
        %vm396 = vcmp.lt.s32.totalorder %v395, 16
        %v397 = vsel %vm396, %v390, 0.0
        %v398 = vsel %vm396, %v392, 0.0
        %v399 = vadd.f32 %v397, 0.0
        %v400 = vadd.f32 %v378, %v399
        %v401 = vadd.f32 %v398, 0.0
        %v402 = vadd.f32 %v379, %v401
      $region45: #{loss_function_dense.1} parent=35 // loop_footer
        %s377 = sadd.s32 1, %s373
      $region46: #{loss_function_dense.1} parent=35 // loop_footer_branch
        %372 = sbr.rel target = $region42
      $region47: #{loss_function_dense.1} parent=35 // loop_exit
        _
      %v403 = vld [vmem:[%s361] sm:$0xff]
      %v404 = vadd.f32 %v403, %v378
      %405 = vst [vmem:[%s361] sm:$0xff] %v404
      %s406 = scalar_lea.vmem %s361, 8
      %v407 = vld [vmem:[%s406] sm:$0xff]
      %v408 = vadd.f32 %v407, %v379
      %409 = vst [vmem:[%s406] sm:$0xff] %v408
      %p410 = scmp.lt.s32.totalorder %s19, 1
      %s411 = scalar_select %p410, %s19, 1
      %s412 = smul.addr %s411, 2
      %s413 = smul.addr %s412, 8
      %s414 = scalar_lea.vmem %s4, %s413
      // Predicated region
      $region48: #{loss_function_dense.1} parent=35 // pred_check
        %p415 = pneg %p173
      $region49: #{loss_function_dense.1} parent=35 // pred_check_branch
        %417 = sbr.rel (%p415) target = $region51
      $region50: #{loss_function_dense.1} parent=35 // pred_region
        _
      $region51: #{loss_function_dense.1} parent=35 // pred_fallthru
        _
    $region36: #{loss_function_dense.1} parent=5 // pred_fallthru
      _
    %p418 = scmp.le.s32.totalorder 2, %s10
    // Predicated region
    $region52: #{loss_function_dense.1} parent=5 // pred_check
      %p419 = pneg %p418
    $region53: #{loss_function_dense.1} parent=5 // pred_check_branch
      %421 = sbr.rel (%p419) target = $region55
    $region54: #{loss_function_dense.1} parent=5 // pred_region
      %s422 = ssub.s32 %s10, 2
      // Predicated region
      $region56: #{loss_function_dense.1} parent=54 // pred_check
        %p423 = pneg %p179
      $region57: #{loss_function_dense.1} parent=54 // pred_check_branch
        %425 = sbr.rel (%p423) target = $region59
      $region58: #{loss_function_dense.1} parent=54 // pred_region
        %p426 = scmp.lt.s32.totalorder %s21, 1
        %s427 = scalar_select %p426, %s21, 1
        %s428 = smul.addr %s427, 2
        %s429 = smul.addr %s428, 8
        %s430 = scalar_lea.vmem %s4, %s429
      $region59: #{loss_function_dense.1} parent=54 // pred_fallthru
        _
    $region55: #{loss_function_dense.1} parent=5 // pred_fallthru
      _
  $region6: #{loss_function_dense.1} parent=0 // loop_footer
    %s14 = sadd.s32 1, %s10
  $region7: #{loss_function_dense.1} parent=0 // loop_footer_branch
    %9 = sbr.rel target = $region3
  $region8: #{loss_function_dense.1} parent=0 // loop_exit
    _

</llo_original>
